<compile_context>
chip_gen: v7x
topology: tpu7x:2x2x1
jax: 0.10.0
libtpu: 0.0.40
codegen_flags: <defaults>
</compile_context>

<pallas_src>
import functools

import jax
import jax.numpy as jnp
from jax.experimental import pallas as pl
from jax.experimental.pallas import tpu as pltpu


def _conv_relu_kernel(x_ref, mask_ref, w_ref, b_ref, o_ref, *, img_w):
    # x_ref   : (Nb, Cin, H*W)   Nb images, channels-first, flat spatial
    # mask_ref: (9, H*W)         one border-validity row per tap
    # w_ref   : (Cout, 9*Cin)    matmul-ready weights
    # b_ref   : (Cout, 1)        bias column
    # o_ref   : (Nb, Cout, H*W)  output block (lane dim = H*W, lane-dense)
    nb, cin, hw = x_ref.shape

    w = w_ref[...]                                   # (Cout, 9*Cin)
    b = b_ref[...]                                   # (Cout, 1)
    mask = mask_ref[...]                             # (9, H*W)
    mask_rows = [mask[t:t + 1, :] for t in range(9)]  # hoisted out of img loop

    for i in range(nb):                              # static unroll over images
        x = x_ref[i]                                 # (Cin, H*W)

        # Stage the 9 spatial taps as lane-rolled, border-masked vregs.
        taps = []
        t = 0
        for dy in range(3):
            for dx in range(3):
                off = (dy - 1) * img_w + (dx - 1)    # flat-index offset
                shift = (-off) % hw
                rolled = x if shift == 0 else pltpu.roll(x, shift, axis=1)
                if dy == 1 and dx == 1:
                    taps.append(rolled)              # center tap: always valid
                else:
                    taps.append(rolled * mask_rows[t])   # (1,HW) bcast over Cin
                t += 1
        x_taps = jnp.concatenate(taps, axis=0)       # (9*Cin, H*W), in vregs

        # One MXU matmul + f32 epilogue (bias, ReLU); cast at the store.
        acc = jnp.dot(w, x_taps, preferred_element_type=jnp.float32)
        acc = jnp.maximum(acc + b, 0.0)              # (Cout, H*W)
        o_ref[i] = acc.astype(o_ref.dtype)           # lane-dense unmasked store


def conv_relu(x_nchw, weight, bias):
    """3x3 conv (padding=1) + ReLU. x_nchw: (N,Cin,H,W); weight: (Cout,Cin,3,3)."""
    N, Cin, H, W = x_nchw.shape
    Cout = weight.shape[0]
    HW = H * W

    # Free, contiguous reshape — no transpose / pad HBM passes.
    x_flat = x_nchw.reshape(N, Cin, HW)

    # Matmul-ready weights: (Cout, Cin, 3, 3) -> (Cout, 9*Cin) with column
    # index (dy*3 + dx)*Cin + cin, matching the in-kernel tap staging order.
    w_mat = jnp.transpose(weight, (0, 2, 3, 1)).reshape(Cout, 9 * Cin)
    b_col = bias.reshape(Cout, 1)

    # Border-validity masks, one row per tap: zero where the tap would read
    # outside the image (padding=1 semantics). Tiny (9 x HW), VMEM-resident.
    h_ids = jnp.arange(H)[:, None]
    w_ids = jnp.arange(W)[None, :]
    rows = []
    for dy in range(3):
        for dx in range(3):
            dr, dc = dy - 1, dx - 1
            valid = ((h_ids + dr >= 0) & (h_ids + dr < H) &
                     (w_ids + dc >= 0) & (w_ids + dc < W))        # (H, W)
            rows.append(valid.reshape(1, HW))
    mask_arr = jnp.concatenate(rows, axis=0).astype(x_nchw.dtype)  # (9, HW)

    # Images per grid step: keep a parallel grid extent of 2 when N is even
    # (both v7x TCs busy) while amortizing per-step overhead for larger N on
    # single-TC v5e/v6e; fall back to a single step for odd/small N.
    nb = N // 2 if (N % 2 == 0 and N >= 2) else N
    grid_n = N // nb

    kernel = functools.partial(_conv_relu_kernel, img_w=W)

    out_flat = pl.pallas_call(
        kernel,
        out_shape=jax.ShapeDtypeStruct((N, Cout, HW), x_nchw.dtype),
        grid_spec=pltpu.PrefetchScalarGridSpec(
            num_scalar_prefetch=0,
            grid=(grid_n,),
            in_specs=[
                pl.BlockSpec((nb, Cin, HW), lambda n: (n, 0, 0)),
                pl.BlockSpec((9, HW), lambda n: (0, 0)),
                pl.BlockSpec((Cout, 9 * Cin), lambda n: (0, 0)),
                pl.BlockSpec((Cout, 1), lambda n: (0, 0)),
            ],
            out_specs=pl.BlockSpec((nb, Cout, HW), lambda n: (n, 0, 0)),
        ),
        compiler_params=pltpu.CompilerParams(
            dimension_semantics=("parallel",),
            vmem_limit_bytes=32 * 1024 * 1024,
        ),
    )(x_flat, mask_arr, w_mat, b_col)

    # Free reshape back to NCHW (matches PyTorch output convention).
    return out_flat.reshape(N, Cout, H, W)


def _reference_conv_relu(x_nchw, weight, bias):
    y = jax.lax.conv_general_dilated(
        x_nchw, weight, window_strides=(1, 1), padding=((1, 1), (1, 1)),
        dimension_numbers=("NCHW", "OIHW", "NCHW"))
    y = y + bias[None, :, None, None]
    return jnp.maximum(y, 0.0)


if __name__ == "__main__":
    key = jax.random.PRNGKey(0)
    kx, kw, kb = jax.random.split(key, 3)

    N, Cin, Cout, H, W = 2, 4, 8, 16, 16
    x = jax.random.normal(kx, (N, Cin, H, W), dtype=jnp.float32)
    # Deterministic parameter init (mimicking Conv2d's uniform init scale).
    fan_in = Cin * 3 * 3
    bound = 1.0 / (fan_in ** 0.5)
    weight = jax.random.uniform(kw, (Cout, Cin, 3, 3), dtype=jnp.float32,
                                minval=-bound, maxval=bound)
    bias = jax.random.uniform(kb, (Cout,), dtype=jnp.float32,
                              minval=-bound, maxval=bound)

    out = conv_relu(x, weight, bias)
    jax.block_until_ready(out)

    ref = _reference_conv_relu(x, weight, bias)
    assert out.shape == (N, Cout, H, W)
    assert jnp.allclose(out, ref, atol=1e-5, rtol=1e-5)

    print("KERNEL_OK")
</pallas_src>

<mosaic_0001>
module attributes {stable_mosaic.version = 11 : i64} {
  func.func @_conv_relu_kernel(%arg0: i32, %arg1: memref<1x4x256xf32, #tpu.memory_space<vmem>>, %arg2: memref<9x256xf32, #tpu.memory_space<vmem>>, %arg3: memref<8x36xf32, #tpu.memory_space<vmem>>, %arg4: memref<8x1xf32, #tpu.memory_space<vmem>>, %arg5: memref<1x8x256xf32, #tpu.memory_space<vmem>>) attributes {dimension_semantics = [#tpu.dimension_semantics<parallel>], iteration_bounds = array<i64: 2>, scalar_prefetch = 0 : i64, scratch_operands = 0 : i64, tpu.core_type = #tpu.core_type<tc>, window_params = [{transform_indices = @transform_0, window_bounds = array<i64: 1, 4, 256>}, {pipeline_mode = #tpu.pipeline_mode<synchronous>, transform_indices = @transform_1, window_bounds = array<i64: 9, 256>}, {pipeline_mode = #tpu.pipeline_mode<synchronous>, transform_indices = @transform_2, window_bounds = array<i64: 8, 36>}, {pipeline_mode = #tpu.pipeline_mode<synchronous>, transform_indices = @transform_3, window_bounds = array<i64: 8, 1>}, {transform_indices = @transform_4, window_bounds = array<i64: 1, 8, 256>}]} {
    %c0 = arith.constant 0 : index
    %c0_0 = arith.constant 0 : index
    %0 = vector.load %arg3[%c0, %c0_0] : memref<8x36xf32, #tpu.memory_space<vmem>>, vector<8x36xf32>
    %c0_1 = arith.constant 0 : index
    %c0_2 = arith.constant 0 : index
    %1 = vector.load %arg4[%c0_1, %c0_2] : memref<8x1xf32, #tpu.memory_space<vmem>>, vector<8x1xf32>
    %c0_3 = arith.constant 0 : index
    %c0_4 = arith.constant 0 : index
    %2 = vector.load %arg2[%c0_3, %c0_4] : memref<9x256xf32, #tpu.memory_space<vmem>>, vector<9x256xf32>
    %3 = vector.extract_strided_slice %2 {offsets = [0, 0], sizes = [1, 256], strides = [1, 1]} : vector<9x256xf32> to vector<1x256xf32>
    %4 = vector.extract_strided_slice %2 {offsets = [1, 0], sizes = [1, 256], strides = [1, 1]} : vector<9x256xf32> to vector<1x256xf32>
    %5 = vector.extract_strided_slice %2 {offsets = [2, 0], sizes = [1, 256], strides = [1, 1]} : vector<9x256xf32> to vector<1x256xf32>
    %6 = vector.extract_strided_slice %2 {offsets = [3, 0], sizes = [1, 256], strides = [1, 1]} : vector<9x256xf32> to vector<1x256xf32>
    %7 = vector.extract_strided_slice %2 {offsets = [5, 0], sizes = [1, 256], strides = [1, 1]} : vector<9x256xf32> to vector<1x256xf32>
    %8 = vector.extract_strided_slice %2 {offsets = [6, 0], sizes = [1, 256], strides = [1, 1]} : vector<9x256xf32> to vector<1x256xf32>
    %9 = vector.extract_strided_slice %2 {offsets = [7, 0], sizes = [1, 256], strides = [1, 1]} : vector<9x256xf32> to vector<1x256xf32>
    %10 = vector.extract_strided_slice %2 {offsets = [8, 0], sizes = [1, 256], strides = [1, 1]} : vector<9x256xf32> to vector<1x256xf32>
    %c0_5 = arith.constant 0 : index
    %c0_6 = arith.constant 0 : index
    %c0_7 = arith.constant 0 : index
    %11 = vector.load %arg1[%c0_5, %c0_6, %c0_7] : memref<1x4x256xf32, #tpu.memory_space<vmem>>, vector<1x4x256xf32>
    %12 = vector.shape_cast %11 : vector<1x4x256xf32> to vector<4x256xf32>
    %c17_i32 = arith.constant 17 : i32
    %13 = tpu.dynamic_rotate %12 by %c17_i32 dim 1 : vector<4x256xf32>, i32 -> vector<4x256xf32>
    %14 = vector.broadcast %3 : vector<1x256xf32> to vector<4x256xf32>
    %15 = arith.mulf %13, %14 : vector<4x256xf32>
    %c16_i32 = arith.constant 16 : i32
    %16 = tpu.dynamic_rotate %12 by %c16_i32 dim 1 : vector<4x256xf32>, i32 -> vector<4x256xf32>
    %17 = vector.broadcast %4 : vector<1x256xf32> to vector<4x256xf32>
    %18 = arith.mulf %16, %17 : vector<4x256xf32>
    %c15_i32 = arith.constant 15 : i32
    %19 = tpu.dynamic_rotate %12 by %c15_i32 dim 1 : vector<4x256xf32>, i32 -> vector<4x256xf32>
    %20 = vector.broadcast %5 : vector<1x256xf32> to vector<4x256xf32>
    %21 = arith.mulf %19, %20 : vector<4x256xf32>
    %c1_i32 = arith.constant 1 : i32
    %22 = tpu.dynamic_rotate %12 by %c1_i32 dim 1 : vector<4x256xf32>, i32 -> vector<4x256xf32>
    %23 = vector.broadcast %6 : vector<1x256xf32> to vector<4x256xf32>
    %24 = arith.mulf %22, %23 : vector<4x256xf32>
    %c255_i32 = arith.constant 255 : i32
    %25 = tpu.dynamic_rotate %12 by %c255_i32 dim 1 : vector<4x256xf32>, i32 -> vector<4x256xf32>
    %26 = vector.broadcast %7 : vector<1x256xf32> to vector<4x256xf32>
    %27 = arith.mulf %25, %26 : vector<4x256xf32>
    %c241_i32 = arith.constant 241 : i32
    %28 = tpu.dynamic_rotate %12 by %c241_i32 dim 1 : vector<4x256xf32>, i32 -> vector<4x256xf32>
    %29 = vector.broadcast %8 : vector<1x256xf32> to vector<4x256xf32>
    %30 = arith.mulf %28, %29 : vector<4x256xf32>
    %c240_i32 = arith.constant 240 : i32
    %31 = tpu.dynamic_rotate %12 by %c240_i32 dim 1 : vector<4x256xf32>, i32 -> vector<4x256xf32>
    %32 = vector.broadcast %9 : vector<1x256xf32> to vector<4x256xf32>
    %33 = arith.mulf %31, %32 : vector<4x256xf32>
    %c239_i32 = arith.constant 239 : i32
    %34 = tpu.dynamic_rotate %12 by %c239_i32 dim 1 : vector<4x256xf32>, i32 -> vector<4x256xf32>
    %35 = vector.broadcast %10 : vector<1x256xf32> to vector<4x256xf32>
    %36 = arith.mulf %34, %35 : vector<4x256xf32>
    %37 = tpu.concatenate %15, %18, %21, %24, %12, %27, %30, %33, %36 in 0 : vector<4x256xf32>, vector<4x256xf32>, vector<4x256xf32>, vector<4x256xf32>, vector<4x256xf32>, vector<4x256xf32>, vector<4x256xf32>, vector<4x256xf32>, vector<4x256xf32> -> vector<36x256xf32>
    %cst = arith.constant dense<0.000000e+00> : vector<8x256xf32>
    %38 = tpu.matmul %0, %37, %cst {dimension_numbers = #tpu.dot_dimension_numbers<[1], [0], [0], [1], [0, 0, 1, 1], [], []>} : vector<8x36xf32>, vector<36x256xf32>, vector<8x256xf32> -> vector<8x256xf32>
    %39 = vector.broadcast %1 : vector<8x1xf32> to vector<8x256xf32>
    %40 = arith.addf %38, %39 : vector<8x256xf32>
    %cst_8 = arith.constant 0.000000e+00 : f32
    %41 = vector.broadcast %cst_8 : f32 to vector<8x256xf32>
    %42 = arith.maximumf %40, %41 : vector<8x256xf32>
    %c0_9 = arith.constant 0 : index
    %c0_10 = arith.constant 0 : index
    %c0_11 = arith.constant 0 : index
    %43 = vector.load %arg5[%c0_9, %c0_10, %c0_11] : memref<1x8x256xf32, #tpu.memory_space<vmem>>, vector<1x8x256xf32>
    %44 = vector.shape_cast %43 : vector<1x8x256xf32> to vector<8x256xf32>
    %45 = vector.shape_cast %42 : vector<8x256xf32> to vector<1x8x256xf32>
    tpu.vector_store %arg5[%c0_9, %c0_10, %c0_11], %45 {strides = array<i32>} : memref<1x8x256xf32, #tpu.memory_space<vmem>>, vector<1x8x256xf32>,
    return
  }
  func.func @transform_0(%arg0: i32) -> (i32, i32, i32) {
    %c0_i32 = arith.constant 0 : i32
    %c0_i32_0 = arith.constant 0 : i32
    %c0_i32_1 = arith.constant 0 : i32
    return %arg0, %c0_i32, %c0_i32_0 : i32, i32, i32
  }
  func.func @transform_1(%arg0: i32) -> (i32, i32) {
    %c0_i32 = arith.constant 0 : i32
    %c0_i32_0 = arith.constant 0 : i32
    %c0_i32_1 = arith.constant 0 : i32
    return %c0_i32, %c0_i32_0 : i32, i32
  }
  func.func @transform_2(%arg0: i32) -> (i32, i32) {
    %c0_i32 = arith.constant 0 : i32
    %c0_i32_0 = arith.constant 0 : i32
    %c0_i32_1 = arith.constant 0 : i32
    return %c0_i32, %c0_i32_0 : i32, i32
  }
  func.func @transform_3(%arg0: i32) -> (i32, i32) {
    %c0_i32 = arith.constant 0 : i32
    %c0_i32_0 = arith.constant 0 : i32
    %c0_i32_1 = arith.constant 0 : i32
    return %c0_i32, %c0_i32_0 : i32, i32
  }
  func.func @transform_4(%arg0: i32) -> (i32, i32, i32) {
    %c0_i32 = arith.constant 0 : i32
    %c0_i32_0 = arith.constant 0 : i32
    %c0_i32_1 = arith.constant 0 : i32
    return %arg0, %c0_i32, %c0_i32_0 : i32, i32, i32
  }
}

</mosaic_0001>

<llo_original>
// kernel: tpu_custom_call.1
$region0: #{tpu_custom_call.1}
  #allocation0 [shape = 'u32[]', space=smem, size = 0x4, offset = 0x4, fixed_abs, tag = 'smem constant byte address 0x4 - core index']
  #allocation1 [shape = 'u32[144,128]{1,0:T(1,128)}', space=vmem, size = 0x12000, scoped, tag = 'internal scratch']
  %s0 = inlined_call_operand.hbm [shape: f32[2,4,256], index: 0, kind: input, shape index: {}]
  %s1 = inlined_call_operand.hbm [shape: f32[9,256], index: 1, kind: input, shape index: {}]
  %s2 = inlined_call_operand.vmem [shape: f32[8,36], index: 2, kind: input, shape index: {}]
  %s3 = inlined_call_operand.vmem [shape: f32[8,1], index: 3, kind: input, shape index: {}]
  %s4 = inlined_call_operand.hbm [shape: f32[2,8,256], index: 4, kind: output, shape index: {}]
  %s5 = sld [smem:[#allocation0]]
  $region57: #{tpu_custom_call.1} parent=0
    _
  %s7 = ssub.s32 1, %s5
  %s8 = scalar_select 0, %s7, %s5
  $region1: #{tpu_custom_call.1} parent=0
    #allocation2 [shape = 'u8[8192]{0}', space=vmem, size = 0x2000, scoped, tag = 'input window, operand 0']
    #allocation3 [shape = 's32[2]{0}', space=sflag, size = 0x8, scoped, tag = 'scoped memory for tpu_custom_call.1']
    #allocation4 [shape = 's32[2]{0}', space=sflag, size = 0x8, scoped, tag = 'scoped memory for tpu_custom_call.1']
    #allocation5 [shape = 'u8[16384]{0}', space=vmem, size = 0x4000, scoped, tag = 'input window, operand 1, single buffered']
    #allocation6 [shape = 's32[1]{0}', space=sflag, size = 0x4, scoped, tag = 'scoped memory for tpu_custom_call.1']
    #allocation7 [shape = 'u8[16384]{0}', space=vmem, size = 0x4000, scoped, tag = 'output window, operand 0']
    %9 = vsyncpa [#allocation3], 0
    %s10 = scalar_lea.sflag [#allocation3], 1
    %11 = vsyncpa %s10, 0
    %12 = vsyncpa [#allocation6], 0
    %13 = vsyncpa [#allocation4], 0
    %s14 = scalar_lea.sflag [#allocation4], 1
    %15 = vsyncpa %s14, 0
    loop: start=0, step=1, limit=4
    $region2: #{tpu_custom_call.1} parent=1 // loop_pre_header
      _
    $region3: #{tpu_custom_call.1} parent=1 // loop_header
      %s17 = sphi 0, %s21
      %p18 = scmp.ge.s32.totalorder %s17, 4
      %s27 = sphi 0, %s29
      %s30 = sphi 0, %s27
      %s31 = sphi 0, %s30
      %s47 = sphi 0, %s31
      %s51 = sphi 0, %s51
      %s53 = sphi 0, %s51
      %s54 = sphi 0, %s53
      %s68 = sphi 0, %s54
      %s72 = sphi 0, %s72
      %s74 = sphi 0, %s72
      %s75 = sphi 0, %s74
      %s89 = sphi 0, %s75
      %s93 = sphi 0, %s93
      %s95 = sphi 0, %s93
      %s96 = sphi 0, %s95
      %s110 = sphi 0, %s96
      %s116 = sphi 0, %s118
      %s119 = sphi 0, %s116
      %s120 = sphi 0, %s119
      %s136 = sphi 0, %s120
    $region4: #{tpu_custom_call.1} parent=1 // loop_header_branch
      %20 = sbr.rel (%p18) target = $region8
    $region5: #{tpu_custom_call.1} parent=1 // loop_body
      %s22 = ssub.s32 %s17, 1
      %s23 = ssub.s32 %s17, 2
      %s24 = sadd.s32 %s17, 1
      %s25 = ssub.s32 %s17, %s24
      %p26 = scmp.eq.s32.totalorder %s25, 0
      %s28 = sadd.s32 %s27, 1
      %s29 = scalar_select %p26, %s27, %s28
      %p32 = pneg %p26
      %p33 = scmp.eq.s32.totalorder %s17, 1
      %p34 = por %p32, %p33
      %p35 = scmp.ne.s32.totalorder %s27, %s30
      %p36 = scmp.eq.s32.totalorder %s17, 0
      %p37 = por %p35, %p36
      %p38 = scmp.ne.s32.totalorder %s27, %s30
      %p39 = scmp.eq.s32.totalorder %s22, 1
      %p40 = por %p38, %p39
      %p41 = scmp.ne.s32.totalorder %s30, %s31
      %p42 = scmp.eq.s32.totalorder %s22, 0
      %p43 = por %p41, %p42
      %p44 = scmp.ne.s32.totalorder %s30, %s31
      %p45 = scmp.eq.s32.totalorder %s23, 1
      %p46 = por %p44, %p45
      %p48 = scmp.ne.s32.totalorder %s31, %s47
      %p49 = scmp.eq.s32.totalorder %s23, 0
      %p50 = por %p48, %p49
      %s52 = sadd.s32 %s51, 1
      %p55 = scmp.eq.s32.totalorder %s17, 1
      %p56 = scmp.ne.s32.totalorder %s51, %s53
      %p57 = scmp.eq.s32.totalorder %s17, 0
      %p58 = por %p56, %p57
      %p59 = scmp.ne.s32.totalorder %s51, %s53
      %p60 = scmp.eq.s32.totalorder %s22, 1
      %p61 = por %p59, %p60
      %p62 = scmp.ne.s32.totalorder %s53, %s54
      %p63 = scmp.eq.s32.totalorder %s22, 0
      %p64 = por %p62, %p63
      %p65 = scmp.ne.s32.totalorder %s53, %s54
      %p66 = scmp.eq.s32.totalorder %s23, 1
      %p67 = por %p65, %p66
      %p69 = scmp.ne.s32.totalorder %s54, %s68
      %p70 = scmp.eq.s32.totalorder %s23, 0
      %p71 = por %p69, %p70
      %s73 = sadd.s32 %s72, 1
      %p76 = scmp.eq.s32.totalorder %s17, 1
      %p77 = scmp.ne.s32.totalorder %s72, %s74
      %p78 = scmp.eq.s32.totalorder %s17, 0
      %p79 = por %p77, %p78
      %p80 = scmp.ne.s32.totalorder %s72, %s74
      %p81 = scmp.eq.s32.totalorder %s22, 1
      %p82 = por %p80, %p81
      %p83 = scmp.ne.s32.totalorder %s74, %s75
      %p84 = scmp.eq.s32.totalorder %s22, 0
      %p85 = por %p83, %p84
      %p86 = scmp.ne.s32.totalorder %s74, %s75
      %p87 = scmp.eq.s32.totalorder %s23, 1
      %p88 = por %p86, %p87
      %p90 = scmp.ne.s32.totalorder %s75, %s89
      %p91 = scmp.eq.s32.totalorder %s23, 0
      %p92 = por %p90, %p91
      %s94 = sadd.s32 %s93, 1
      %p97 = scmp.eq.s32.totalorder %s17, 1
      %p98 = scmp.ne.s32.totalorder %s93, %s95
      %p99 = scmp.eq.s32.totalorder %s17, 0
      %p100 = por %p98, %p99
      %p101 = scmp.ne.s32.totalorder %s93, %s95
      %p102 = scmp.eq.s32.totalorder %s22, 1
      %p103 = por %p101, %p102
      %p104 = scmp.ne.s32.totalorder %s95, %s96
      %p105 = scmp.eq.s32.totalorder %s22, 0
      %p106 = por %p104, %p105
      %p107 = scmp.ne.s32.totalorder %s95, %s96
      %p108 = scmp.eq.s32.totalorder %s23, 1
      %p109 = por %p107, %p108
      %p111 = scmp.ne.s32.totalorder %s96, %s110
      %p112 = scmp.eq.s32.totalorder %s23, 0
      %p113 = por %p111, %p112
      %s114 = ssub.s32 %s17, %s24
      %p115 = scmp.eq.s32.totalorder %s114, 0
      %s117 = sadd.s32 %s116, 1
      %s118 = scalar_select %p115, %s116, %s117
      %p121 = pneg %p115
      %p122 = scmp.eq.s32.totalorder %s17, 1
      %p123 = por %p121, %p122
      %p124 = scmp.ne.s32.totalorder %s116, %s119
      %p125 = scmp.eq.s32.totalorder %s17, 0
      %p126 = por %p124, %p125
      %p127 = scmp.ne.s32.totalorder %s116, %s119
      %p128 = scmp.eq.s32.totalorder %s22, 1
      %p129 = por %p127, %p128
      %p130 = scmp.ne.s32.totalorder %s119, %s120
      %p131 = scmp.eq.s32.totalorder %s22, 0
      %p132 = por %p130, %p131
      %p133 = scmp.ne.s32.totalorder %s119, %s120
      %p134 = scmp.eq.s32.totalorder %s23, 1
      %p135 = por %p133, %p134
      %p137 = scmp.ne.s32.totalorder %s120, %s136
      %p138 = scmp.eq.s32.totalorder %s23, 0
      %p139 = por %p137, %p138
      %p140 = scmp.le.s32.totalorder 1, %s17
      %p141 = scmp.lt.s32.totalorder %s17, 3
      %p142 = pnand %p140, %p141
      %p143 = pneg %p142
      // Predicated region
      $region9: #{tpu_custom_call.1} parent=5 // pred_check
        _
      $region10: #{tpu_custom_call.1} parent=5 // pred_check_branch
        %145 = sbr.rel (%p142) target = $region12
      $region11: #{tpu_custom_call.1} parent=5 // pred_region
        %s146 = ssub.s32 %s17, 1
        // Predicated region
        $region13: #{tpu_custom_call.1} parent=11 // pred_check
          %p147 = pneg %p64
        $region14: #{tpu_custom_call.1} parent=11 // pred_check_branch
          %149 = sbr.rel (%p147) target = $region16
        $region15: #{tpu_custom_call.1} parent=11 // pred_region
          %s151 = ssub.s32 512, 512
          %152 = vsyncadd [#allocation6], %s151
          %s153 = sshll.u32 [#allocation5], 4
          %s154 = int_to_ptr.vmem [resolvable:$true] %s153
          %159 = dma.hbm_to_vmem [thread:$0]  %s1, 512, %s154, [#allocation6], 256, 256, 16
        $region16: #{tpu_custom_call.1} parent=11 // pred_fallthru
          _
        // Predicated region
        $region17: #{tpu_custom_call.1} parent=11 // pred_check
          %p160 = pneg %p85
        $region18: #{tpu_custom_call.1} parent=11 // pred_check_branch
          %162 = sbr.rel (%p160) target = $region20
        $region19: #{tpu_custom_call.1} parent=11 // pred_region
          _
        $region20: #{tpu_custom_call.1} parent=11 // pred_fallthru
          _
        // Predicated region
        $region21: #{tpu_custom_call.1} parent=11 // pred_check
          %p163 = pneg %p106
        $region22: #{tpu_custom_call.1} parent=11 // pred_check_branch
          %165 = sbr.rel (%p163) target = $region24
        $region23: #{tpu_custom_call.1} parent=11 // pred_region
          _
        $region24: #{tpu_custom_call.1} parent=11 // pred_fallthru
          _
      $region12: #{tpu_custom_call.1} parent=5 // pred_fallthru
        _
      %p166 = scmp.lt.s32.totalorder %s17, 2
      // Predicated region
      $region25: #{tpu_custom_call.1} parent=5 // pred_check
        %p167 = pneg %p166
      $region26: #{tpu_custom_call.1} parent=5 // pred_check_branch
        %169 = sbr.rel (%p167) target = $region28
      $region27: #{tpu_custom_call.1} parent=5 // pred_region
        // Predicated region
        $region29: #{tpu_custom_call.1} parent=27 // pred_check
          %p170 = pneg %p37
        $region30: #{tpu_custom_call.1} parent=27 // pred_check_branch
          %172 = sbr.rel (%p170) target = $region32
        $region31: #{tpu_custom_call.1} parent=27 // pred_region
          %s173 = sand.u32 %s27, 1
          %s174 = scalar_lea.sflag [#allocation3], %s173
          %s175 = sand.u32 %s27, 1
          %s176 = smul.addr %s175, 8
          %s177 = scalar_lea.vmem [#allocation2], %s176
          %s179 = ssub.s32 128, 128
          %180 = vsyncadd %s174, %s179
          %s181 = smul.addr %s17, 2
          %s182 = smul.addr %s181, 64
          %s183 = scalar_lea.hbm %s0, %s182
          %s185 = sshll.u32 %s177, 4
          %s186 = int_to_ptr.vmem [resolvable:$true] %s185
          %188 = dma.hbm_to_vmem [thread:$0]  %s183, 128, %s186, %s174
        $region32: #{tpu_custom_call.1} parent=27 // pred_fallthru
          _
      $region28: #{tpu_custom_call.1} parent=5 // pred_fallthru
        _
      %p189 = scmp.le.s32.totalorder 1, %s17
      %p190 = scmp.lt.s32.totalorder %s17, 3
      %p191 = pnand %p189, %p190
      %p192 = pneg %p191
      // Predicated region
      $region33: #{tpu_custom_call.1} parent=5 // pred_check
        _
      $region34: #{tpu_custom_call.1} parent=5 // pred_check_branch
        %194 = sbr.rel (%p191) target = $region36
      $region35: #{tpu_custom_call.1} parent=5 // pred_region
        %s195 = ssub.s32 %s17, 1
        %s196 = sand.u32 %s30, 1
        %s197 = scalar_lea.sflag [#allocation3], %s196
        %s198 = sand.u32 %s30, 1
        %s199 = smul.addr %s198, 8
        %s200 = scalar_lea.vmem [#allocation2], %s199
        // Predicated region
        $region37: #{tpu_custom_call.1} parent=35 // pred_check
          %p201 = pneg %p43
        $region38: #{tpu_custom_call.1} parent=35 // pred_check_branch
          %203 = sbr.rel (%p201) target = $region40
        $region39: #{tpu_custom_call.1} parent=35 // pred_region
          %204 = dma.done %s197, 128
        $region40: #{tpu_custom_call.1} parent=35 // pred_fallthru
          _
        // Predicated region
        $region41: #{tpu_custom_call.1} parent=35 // pred_check
          %p205 = pneg %p64
        $region42: #{tpu_custom_call.1} parent=35 // pred_check_branch
          %207 = sbr.rel (%p205) target = $region44
        $region43: #{tpu_custom_call.1} parent=35 // pred_region
          %208 = dma.done [#allocation6], 512
        $region44: #{tpu_custom_call.1} parent=35 // pred_fallthru
          _
        %s209 = sand.u32 %s30, 1
        %s210 = scalar_lea.sflag [#allocation3], %s209
        %s211 = sand.u32 %s30, 1
        %s212 = smul.addr %s211, 8
        %s213 = scalar_lea.vmem [#allocation2], %s212
        %p214 = pneg %p43
        %p215 = pneg %p40
        %p216 = pneg %p64
        %p217 = pneg %p61
        %p218 = pneg %p85
        %p219 = pneg %p82
        %p220 = pneg %p106
        %p221 = pneg %p103
        %p222 = pneg %p132
        %p223 = pneg %p129
        %s224 = sand.u32 %s119, 1
        %s225 = scalar_lea.sflag [#allocation4], %s224
        %s226 = sand.u32 %s119, 1
        %s227 = smul.addr %s226, 16
        %s228 = scalar_lea.vmem [#allocation7], %s227
        %v229 = vld [vmem:[%s2] sm:$0xff]
        %v230 = vld [vmem:[%s3] sm:$0xff]
        %v231 = vld [vmem:[#allocation5] sm:$0xff]
        %v232 = vld [vmem:[#allocation5 + $0x8] sm:$0xff]
        %v233 = vld [vmem:[#allocation5 + $0x10] sm:$0x1]
        %v234 = vld [vmem:[#allocation5 + $0x18] sm:$0x1]
        %v235 = vld [vmem:[%s200] sm:$0xff]
        %v237 = vcombine.high %v235, %v235
        %239 = vrot.lane.b32.xlu0 %v235, 17
        %v240 = vpop.permute.xlu0 %239
        %241 = vrot.lane.b32.xlu0 %v237, 17
        %v242 = vpop.permute.xlu0 %241
        %v243 = vlaneseq
        %v244 = vand.u32 %v243, 127
        %vm245 = vcmp.lt.s32.totalorder %v244, 17
        %v246 = vsel %vm245, %v240, %v242
        %v247 = vsel %vm245, %v242, %v240
        %v248 = vlaneseq
        %v249 = vshrl.u32 %v248, 7
        %v250 = vsub.s32 0, %v249
        %v251 = vrot.slane %v231, %v250
        %v252 = vlaneseq
        %v253 = vshrl.u32 %v252, 7
        %v254 = vsub.s32 0, %v253
        %v255 = vrot.slane %v232, %v254
        %v256 = vmul.f32 %v247, %v251
        %v257 = vmul.f32 %v246, %v255
        %258 = vrot.lane.b32.xlu0 %v235, 16
        %v259 = vpop.permute.xlu0 %258
        %260 = vrot.lane.b32.xlu0 %v237, 16
        %v261 = vpop.permute.xlu0 %260
        %vm262 = vcmp.lt.s32.totalorder %v244, 16
        %v263 = vsel %vm262, %v259, %v261
        %v264 = vsel %vm262, %v261, %v259
        %v265 = vlaneseq
        %v266 = vshrl.u32 %v265, 7
        %v267 = vsub.s32 1, %v266
        %v268 = vrot.slane %v231, %v267
        %v269 = vlaneseq
        %v270 = vshrl.u32 %v269, 7
        %v271 = vsub.s32 1, %v270
        %v272 = vrot.slane %v232, %v271
        %v273 = vmul.f32 %v264, %v268
        %v274 = vmul.f32 %v263, %v272
        %275 = vrot.lane.b32.xlu0 %v235, 15
        %v276 = vpop.permute.xlu0 %275
        %277 = vrot.lane.b32.xlu0 %v237, 15
        %v278 = vpop.permute.xlu0 %277
        %vm279 = vcmp.lt.s32.totalorder %v244, 15
        %v280 = vsel %vm279, %v276, %v278
        %v281 = vsel %vm279, %v278, %v276
        %v282 = vlaneseq
        %v283 = vshrl.u32 %v282, 7
        %v284 = vsub.s32 2, %v283
        %v285 = vrot.slane %v231, %v284
        %v286 = vlaneseq
        %v287 = vshrl.u32 %v286, 7
        %v288 = vsub.s32 2, %v287
        %v289 = vrot.slane %v232, %v288
        %v290 = vmul.f32 %v281, %v285
        %v291 = vmul.f32 %v280, %v289
        %292 = vrot.lane.b32.xlu0 %v235, 1
        %v293 = vpop.permute.xlu0 %292
        %294 = vrot.lane.b32.xlu0 %v237, 1
        %v295 = vpop.permute.xlu0 %294
        %vm296 = vcmp.lt.s32.totalorder %v244, 1
        %v297 = vsel %vm296, %v293, %v295
        %v298 = vsel %vm296, %v295, %v293
        %v299 = vlaneseq
        %v300 = vshrl.u32 %v299, 7
        %v301 = vsub.s32 3, %v300
        %v302 = vrot.slane %v231, %v301
        %v303 = vlaneseq
        %v304 = vshrl.u32 %v303, 7
        %v305 = vsub.s32 3, %v304
        %v306 = vrot.slane %v232, %v305
        %v307 = vmul.f32 %v298, %v302
        %v308 = vmul.f32 %v297, %v306
        %309 = vrot.lane.b32.xlu0 %v235, 127
        %v310 = vpop.permute.xlu0 %309
        %311 = vrot.lane.b32.xlu0 %v237, 127
        %v312 = vpop.permute.xlu0 %311
        %vm313 = vcmp.lt.s32.totalorder %v244, 127
        %v314 = vsel %vm313, %v310, %v312
        %v315 = vsel %vm313, %v312, %v310
        %v316 = vlaneseq
        %v317 = vshrl.u32 %v316, 7
        %v318 = vsub.s32 5, %v317
        %v319 = vrot.slane %v231, %v318
        %v320 = vlaneseq
        %v321 = vshrl.u32 %v320, 7
        %v322 = vsub.s32 5, %v321
        %v323 = vrot.slane %v232, %v322
        %v324 = vmul.f32 %v314, %v319
        %v325 = vmul.f32 %v315, %v323
        %326 = vrot.lane.b32.xlu0 %v235, 113
        %v327 = vpop.permute.xlu0 %326
        %328 = vrot.lane.b32.xlu0 %v237, 113
        %v329 = vpop.permute.xlu0 %328
        %vm330 = vcmp.lt.s32.totalorder %v244, 113
        %v331 = vsel %vm330, %v327, %v329
        %v332 = vsel %vm330, %v329, %v327
        %v333 = vlaneseq
        %v334 = vshrl.u32 %v333, 7
        %v335 = vsub.s32 6, %v334
        %v336 = vrot.slane %v231, %v335
        %v337 = vlaneseq
        %v338 = vshrl.u32 %v337, 7
        %v339 = vsub.s32 6, %v338
        %v340 = vrot.slane %v232, %v339
        %v341 = vmul.f32 %v331, %v336
        %v342 = vmul.f32 %v332, %v340
        %343 = vrot.lane.b32.xlu0 %v235, 112
        %v344 = vpop.permute.xlu0 %343
        %345 = vrot.lane.b32.xlu0 %v237, 112
        %v346 = vpop.permute.xlu0 %345
        %vm347 = vcmp.lt.s32.totalorder %v244, 112
        %v348 = vsel %vm347, %v344, %v346
        %v349 = vsel %vm347, %v346, %v344
        %v350 = vlaneseq
        %v351 = vshrl.u32 %v350, 7
        %v352 = vsub.s32 7, %v351
        %v353 = vrot.slane %v231, %v352
        %v354 = vlaneseq
        %v355 = vshrl.u32 %v354, 7
        %v356 = vsub.s32 7, %v355
        %v357 = vrot.slane %v232, %v356
        %v358 = vmul.f32 %v348, %v353
        %v359 = vmul.f32 %v349, %v357
        %360 = vrot.lane.b32.xlu0 %v235, 111
        %v361 = vpop.permute.xlu0 %360
        %362 = vrot.lane.b32.xlu0 %v237, 111
        %v363 = vpop.permute.xlu0 %362
        %vm364 = vcmp.lt.s32.totalorder %v244, 111
        %v365 = vsel %vm364, %v361, %v363
        %v366 = vsel %vm364, %v363, %v361
        %v367 = vlaneseq
        %v368 = vshrl.u32 %v367, 7
        %v369 = vsub.s32 0, %v368
        %v370 = vrot.slane %v233, %v369
        %v371 = vlaneseq
        %v372 = vshrl.u32 %v371, 7
        %v373 = vsub.s32 0, %v372
        %v374 = vrot.slane %v234, %v373
        %v375 = vmul.f32 %v365, %v370
        %v376 = vmul.f32 %v366, %v374
        %v379 = vrot.slane %v273, 4
        %v380 = vrot.slane %v274, 4
        %v385 = vrot.slane %v307, 4
        %v386 = vrot.slane %v308, 4
        %v391 = vrot.slane %v324, 4
        %v392 = vrot.slane %v325, 4
        %v397 = vrot.slane %v358, 4
        %v398 = vrot.slane %v359, 4
        %vm401 = vcmask 1043456
        %v402 = vsel %vm401, %v256, %v379
        %v403 = vsel %vm401, %v257, %v380
        %v404 = vsel %vm401, %v290, %v385
        %v405 = vsel %vm401, %v291, %v386
        %v406 = vsel %vm401, %v235, %v391
        %v407 = vsel %vm401, %v237, %v392
        %v408 = vsel %vm401, %v341, %v397
        %v409 = vsel %vm401, %v342, %v398
        %411 = vset.pattern.permute.xlu0 0
        %412 = vperm.xlu0 %411, %v230
        %v413 = vpop.permute.xlu0 %412
        %vm415 = vcmask 293888
        %v417 = vsel %vm415, %v229, 0
        %v420 = vsel %vm401, %v375, 0
        %v423 = vsel %vm401, %v376, 0
        %425 = vmatprep.subr.mxu0 %v403
        %426 = vmatpush1.msra.mxu0 %v402
        %427 = vmatprep.subr.mxu0 %v405
        %428 = vmatpush1.msra.mxu0 %v404
        %429 = vmatprep.subr.mxu0 %v407
        %430 = vmatpush1.msra.mxu0 %v406
        %431 = vmatprep.subr.mxu0 %v409
        %432 = vmatpush1.msra.mxu0 %v408
        %433 = vmatprep.subr.mxu0 %v423
        %434 = vmatpush1.msra.mxu0 %v420
        %435 = vmatprep.subr.mxu0 0.0
        %436 = vmatpush1.msra.mxu0 0.0
        %437 = vmatprep.subr.mxu0 0.0
        %438 = vmatpush1.msra.mxu0 0.0
        %439 = vmatprep.subr.mxu0 0.0
        %440 = vmatpush1.msra.mxu0 0.0
        %441 = vmatprep.subr.mxu0 0.0
        %442 = vmatpush1.msra.mxu0 0.0
        %443 = vmatprep.subr.mxu0 0.0
        %444 = vmatpush1.msra.mxu0 0.0
        %445 = vmatprep.subr.mxu0 0.0
        %446 = vmatpush1.msra.mxu0 0.0
        %447 = vmatprep.subr.mxu0 0.0
        %448 = vmatpush1.msra.mxu0 0.0
        %449 = vmatprep.subr.mxu0 0.0
        %450 = vmatpush1.msra.mxu0 0.0
        %451 = vmatprep.subr.mxu0 0.0
        %452 = vmatpush1.msra.mxu0 0.0
        %453 = vmatprep.subr.mxu0 0.0
        %454 = vmatpush1.msra.mxu0 0.0
        %455 = vmatprep.subr.mxu0 0.0
        %456 = vmatpush1.msra.mxu0 0.0
        %457 = vmatprep.subr.mxu0 0.0
        %458 = vmatpush1.msra.mxu0 0.0
        %459 = vmatprep.subr.mxu0 0.0
        %460 = vmatpush1.msra.mxu0 0.0
        %461 = vmatprep.subr.mxu0 0.0
        %462 = vmatpush1.msra.mxu0 0.0
        %463 = vmatprep.subr.mxu0 0.0
        %464 = vmatpush1.msra.mxu0 0.0
        %465 = vmatprep.subr.mxu0 0.0
        %466 = vmatpush1.msra.mxu0 0.0
        %467 = vmatprep.subr.mxu0 0.0
        %468 = vmatpush1.msra.mxu0 0.0
        %469 = vmatprep.subr.mxu0 0.0
        %470 = vmatpush1.msra.mxu0 0.0
        %471 = vmatprep.subr.mxu0 0.0
        %472 = vmatpush1.msra.mxu0 0.0
        %473 = vmatprep.subr.mxu0 0.0
        %474 = vmatpush1.msra.mxu0 0.0
        %475 = vmatprep.subr.mxu0 0.0
        %476 = vmatpush1.msra.mxu0 0.0
        %477 = vmatprep.subr.mxu0 0.0
        %478 = vmatpush1.msra.mxu0 0.0
        %479 = vmatprep.subr.mxu0 0.0
        %480 = vmatpush1.msra.mxu0 0.0
        %481 = vmatprep.subr.mxu0 0.0
        %482 = vmatpush1.msra.mxu0 0.0
        %483 = vmatprep.subr.mxu0 0.0
        %484 = vmatpush1.msra.mxu0 0.0
        %485 = vmatprep.subr.mxu0 0.0
        %486 = vmatpush1.msra.mxu0 0.0
        %487 = vmatprep.subr.mxu0 0.0
        %488 = vmatpush1.msra.mxu0 0.0
        %489 = vmatprep.mubr.f32.mxu0 0.0
        %490 = vmatmul.mubr.f32.gmra.mrb[0].mxu0 %v417
        %v491 = vpop.f32.mrb[0].mxu0
        %v492 = vadd.f32 %v413, %v491
        %v493 = vpop.f32.mrb[0].mxu0
        %v494 = vadd.f32 %v413, %v493
        %495 = vdwg.mxu0
        %v496 = vmax.f32 %v492, 0.0
        %v497 = vmax.f32 %v494, 0.0
        %498 = vst [vmem:[%s228] sm:$0xff] %v496
        %499 = vst [vmem:[%s228 + $0x8] sm:$0xff] %v497
        %s500 = sand.u32 %s119, 1
        %s501 = scalar_lea.sflag [#allocation4], %s500
        %s502 = sand.u32 %s119, 1
        %s503 = smul.addr %s502, 16
        %s504 = scalar_lea.vmem [#allocation7], %s503
        // Predicated region
        $region45: #{tpu_custom_call.1} parent=35 // pred_check
          %p505 = pneg %p129
        $region46: #{tpu_custom_call.1} parent=35 // pred_check_branch
          %507 = sbr.rel (%p505) target = $region48
        $region47: #{tpu_custom_call.1} parent=35 // pred_region
          %s509 = ssub.s32 256, 256
          %510 = vsyncadd %s501, %s509
          %s511 = smul.addr %s22, 2
          %s512 = smul.addr %s511, 128
          %s513 = scalar_lea.hbm %s4, %s512
          %s515 = sshll.u32 %s504, 4
          %s516 = int_to_ptr.vmem [resolvable:$true] %s515
          %518 = dma.vmem_to_hbm [thread:$0]  %s516, 256, %s513, %s501
        $region48: #{tpu_custom_call.1} parent=35 // pred_fallthru
          _
      $region36: #{tpu_custom_call.1} parent=5 // pred_fallthru
        _
      %p519 = scmp.le.s32.totalorder 2, %s17
      // Predicated region
      $region49: #{tpu_custom_call.1} parent=5 // pred_check
        %p520 = pneg %p519
      $region50: #{tpu_custom_call.1} parent=5 // pred_check_branch
        %522 = sbr.rel (%p520) target = $region52
      $region51: #{tpu_custom_call.1} parent=5 // pred_region
        %s523 = ssub.s32 %s17, 2
        // Predicated region
        $region53: #{tpu_custom_call.1} parent=51 // pred_check
          %p524 = pneg %p135
        $region54: #{tpu_custom_call.1} parent=51 // pred_check_branch
          %526 = sbr.rel (%p524) target = $region56
        $region55: #{tpu_custom_call.1} parent=51 // pred_region
          %s527 = sand.u32 %s120, 1
          %s528 = scalar_lea.sflag [#allocation4], %s527
          %s529 = sand.u32 %s120, 1
          %s530 = smul.addr %s529, 16
          %s531 = scalar_lea.vmem [#allocation7], %s530
          %532 = dma.done %s528, 256
        $region56: #{tpu_custom_call.1} parent=51 // pred_fallthru
          _
      $region52: #{tpu_custom_call.1} parent=5 // pred_fallthru
        _
    $region6: #{tpu_custom_call.1} parent=1 // loop_footer
      %s21 = sadd.s32 1, %s17
    $region7: #{tpu_custom_call.1} parent=1 // loop_footer_branch
      %16 = sbr.rel target = $region3
    $region8: #{tpu_custom_call.1} parent=1 // loop_exit
      _
    %533 = vsyncpa [#allocation3], 1
    %s534 = scalar_lea.sflag [#allocation3], 1
    %535 = vsyncpa %s534, 1
    %536 = vsyncpa [#allocation6], 1
    %537 = vsyncpa [#allocation4], 1
    %s538 = scalar_lea.sflag [#allocation4], 1
    %539 = vsyncpa %s538, 1

</llo_original>
